<compile_context>
chip_gen: v7x
topology: tpu7x:2x2x1
jax: 0.10.0
libtpu: 0.0.40
codegen_flags: <defaults>
</compile_context>

<pallas_src>
import jax
import jax.numpy as jnp
from jax.experimental import pallas as pl
from jax.experimental.pallas import tpu as pltpu


def _saem_kernel(x1_ref, x2_ref, w1_ref, b1_ref, w2_ref, b2_ref, wdr_ref, o_ref):
    """One batch element per grid step, channels-first layout.

    x1_ref, x2_ref : (1, C, S)  VMEM (S on lanes -> lane-dense)
    w1_ref, w2_ref : (Ci, C)    1x1x1 conv weights with BN folded in
    b1_ref, b2_ref : (Ci, 1)    conv bias with BN folded in
    wdr_ref        : (1, S)     dim_reduce Conv1d weight (bias=False), lane-dense
    o_ref          : (1, C, S)
    """
    x1 = x1_ref[0]          # (C, S)
    x2 = x2_ref[0]          # (C, S)
    w1 = w1_ref[...]        # (Ci, C)
    w2 = w2_ref[...]        # (Ci, C)
    b1 = b1_ref[...]        # (Ci, 1)
    b2 = b2_ref[...]        # (Ci, 1)
    wdr = wdr_ref[...]      # (1, S)

    # T1 / T2 branches: 1x1x1 conv (+ folded BN) == matmul over channels, + sigmoid.
    t1 = jax.nn.sigmoid(
        jnp.dot(w1, x1, preferred_element_type=jnp.float32) + b1)   # (Ci, S)
    t2 = jax.nn.sigmoid(
        jnp.dot(w2, x2, preferred_element_type=jnp.float32) + b2)   # (Ci, S)

    # Associativity: aff[s] = sum_{s2,c} t1[c,s] t2[c,s2] wdr[s2]
    #              = sum_c t1[c,s] * v[c],  v[c] = sum_{s2} t2[c,s2] wdr[s2]
    v = jnp.sum(t2 * wdr, axis=-1, keepdims=True)      # (Ci, 1)  lane reduce
    aff = jnp.sum(t1 * v, axis=0, keepdims=True)       # (1, S)   sublane reduce

    # Spatial re-weighting of x1 (broadcast over channel).
    o_ref[0] = (x1 * aff).astype(o_ref.dtype)


def spatial_enhance_module(x1, x2, params):
    """x1, x2: (B, C, H, W, L) float32 (PyTorch NCHWL). Returns same shape."""
    B, C, H, W, L = x1.shape
    S = H * W * L
    Ci = params["w_t1"].shape[0]  # inter_channels
    eps = 1e-5

    def fold_bn(conv_w, conv_b, gamma, beta, mean, var):
        # conv_w: (Ci, C) PyTorch-style (out, in); fold eval-mode BN into affine.
        scale = gamma / jnp.sqrt(var + eps)                       # (Ci,)
        w = (conv_w * scale[:, None]).astype(jnp.float32)         # (Ci, C)
        b = (conv_b * scale + (beta - mean * scale)).reshape(Ci, 1).astype(jnp.float32)
        return w, b

    w1, b1 = fold_bn(params["w_t1"], params["b_t1"], params["g1"], params["be1"],
                     params["m1"], params["v1"])
    w2, b2 = fold_bn(params["w_t2"], params["b_t2"], params["g2"], params["be2"],
                     params["m2"], params["v2"])
    wdr = params["w_dr"].reshape(1, S).astype(jnp.float32)

    # Free reshapes only -- no HBM transposes. Kernel works in (B, C, S).
    x1_cs = x1.reshape(B, C, S).astype(jnp.float32)
    x2_cs = x2.reshape(B, C, S).astype(jnp.float32)

    cost = pl.CostEstimate(
        flops=int(B * (2 * (2 * Ci * C * S) + 4 * Ci * S + 2 * C * S)),
        transcendentals=int(B * 2 * Ci * S),
        bytes_accessed=int(3 * B * C * S * 4 + (2 * Ci * C + 2 * Ci + S) * 4),
    )

    # TODO(synk): for very large S (S*C*24 bytes > ~32 MiB) the per-batch block
    # should be tiled over S with a two-pass (v-accumulate, then aff) schedule;
    # not needed at these shapes.
    out_cs = pl.pallas_call(
        _saem_kernel,
        out_shape=jax.ShapeDtypeStruct((B, C, S), jnp.float32),
        grid=(B,),
        in_specs=[
            pl.BlockSpec((1, C, S), lambda b: (b, 0, 0)),
            pl.BlockSpec((1, C, S), lambda b: (b, 0, 0)),
            pl.BlockSpec((Ci, C), lambda b: (0, 0)),
            pl.BlockSpec((Ci, 1), lambda b: (0, 0)),
            pl.BlockSpec((Ci, C), lambda b: (0, 0)),
            pl.BlockSpec((Ci, 1), lambda b: (0, 0)),
            pl.BlockSpec((1, S), lambda b: (0, 0)),
        ],
        out_specs=pl.BlockSpec((1, C, S), lambda b: (b, 0, 0)),
        compiler_params=pltpu.CompilerParams(dimension_semantics=("parallel",)),
        cost_estimate=cost,
    )(x1_cs, x2_cs, w1, b1, w2, b2, wdr)

    # (B, C, S) -> NCHWL (free reshape).
    return out_cs.reshape(B, C, H, W, L)


def _reference(x1, x2, params):
    """Pure-JAX reference mirroring the PyTorch forward (eval-mode BN),
    including the full (S, S) affinity matrix."""
    B, C, H, W, L = x1.shape
    S = H * W * L
    eps = 1e-5

    def branch(x, w, b, g, be, m, v):
        x_flat = x.reshape(B, C, S)                               # (B, C, S)
        y = jnp.einsum("oc,bcs->bos", w, x_flat) + b[None, :, None]
        y = g[None, :, None] * (y - m[None, :, None]) / jnp.sqrt(v[None, :, None] + eps) \
            + be[None, :, None]
        return jax.nn.sigmoid(y)                                  # (B, Ci, S)

    t1 = branch(x1, params["w_t1"], params["b_t1"], params["g1"], params["be1"],
                params["m1"], params["v1"])
    t2 = branch(x2, params["w_t2"], params["b_t2"], params["g2"], params["be2"],
                params["m2"], params["v2"])
    aff_m = jnp.einsum("bcs,bct->bst", t1, t2)                    # (B, S, S)
    aff = jnp.einsum("bst,t->bs", aff_m, params["w_dr"])          # (B, S)
    aff = aff.reshape(B, 1, H, W, L)
    return x1 * aff


if __name__ == "__main__":
    B, C, H, W, L = 2, 4, 4, 4, 4
    Ci = C // 2            # inter_channels default = in_channels // 2
    S = H * W * L          # `size` argument of the module

    key = jax.random.PRNGKey(0)
    ks = jax.random.split(key, 12)

    x1 = jax.random.normal(ks[0], (B, C, H, W, L), dtype=jnp.float32)
    x2 = jax.random.normal(ks[1], (B, C, H, W, L), dtype=jnp.float32)

    params = {
        # T1: Conv3d(C -> Ci, k=1) + BatchNorm3d(Ci)
        "w_t1": 0.2 * jax.random.normal(ks[2], (Ci, C), dtype=jnp.float32),
        "b_t1": 0.1 * jax.random.normal(ks[3], (Ci,), dtype=jnp.float32),
        "g1": 1.0 + 0.05 * jax.random.normal(ks[4], (Ci,), dtype=jnp.float32),
        "be1": 0.05 * jax.random.normal(ks[5], (Ci,), dtype=jnp.float32),
        "m1": 0.1 * jax.random.normal(ks[6], (Ci,), dtype=jnp.float32),
        "v1": 1.0 + 0.1 * jax.random.uniform(ks[7], (Ci,), dtype=jnp.float32),
        # T2: Conv3d(C -> Ci, k=1) + BatchNorm3d(Ci)
        "w_t2": 0.2 * jax.random.normal(ks[8], (Ci, C), dtype=jnp.float32),
        "b_t2": 0.1 * jax.random.normal(ks[9], (Ci,), dtype=jnp.float32),
        "g2": 1.0 + 0.05 * jax.random.normal(ks[10], (Ci,), dtype=jnp.float32),
        "be2": 0.05 * jax.random.normal(ks[11], (Ci,), dtype=jnp.float32),
        "m2": jnp.linspace(-0.1, 0.1, Ci, dtype=jnp.float32),
        "v2": 1.0 + jnp.linspace(0.0, 0.2, Ci, dtype=jnp.float32),
        # dim_reduce: Conv1d(size -> 1, k=1, bias=False); weight (1, S, 1) -> (S,)
        "w_dr": (1.0 / S) * (1.0 + 0.1 * jnp.sin(jnp.arange(S, dtype=jnp.float32))),
    }

    out = spatial_enhance_module(x1, x2, params)
    out = jax.block_until_ready(out)

    ref = _reference(x1, x2, params)
    assert out.shape == (B, C, H, W, L)
    assert jnp.allclose(out, ref, rtol=1e-4, atol=1e-5), "mismatch vs reference"

    print("KERNEL_OK")
</pallas_src>

<mosaic_0001>
module attributes {stable_mosaic.version = 11 : i64} {
  func.func @_saem_kernel(%arg0: i32, %arg1: memref<1x4x64xf32, #tpu.memory_space<vmem>>, %arg2: memref<1x4x64xf32, #tpu.memory_space<vmem>>, %arg3: memref<2x4xf32, #tpu.memory_space<vmem>>, %arg4: memref<2x1xf32, #tpu.memory_space<vmem>>, %arg5: memref<2x4xf32, #tpu.memory_space<vmem>>, %arg6: memref<2x1xf32, #tpu.memory_space<vmem>>, %arg7: memref<1x64xf32, #tpu.memory_space<vmem>>, %arg8: memref<1x4x64xf32, #tpu.memory_space<vmem>>) attributes {dimension_semantics = [#tpu.dimension_semantics<parallel>], iteration_bounds = array<i64: 2>, scalar_prefetch = 0 : i64, scratch_operands = 0 : i64, tpu.core_type = #tpu.core_type<tc>, window_params = [{transform_indices = @transform_0, window_bounds = array<i64: 1, 4, 64>}, {transform_indices = @transform_1, window_bounds = array<i64: 1, 4, 64>}, {pipeline_mode = #tpu.pipeline_mode<synchronous>, transform_indices = @transform_2, window_bounds = array<i64: 2, 4>}, {pipeline_mode = #tpu.pipeline_mode<synchronous>, transform_indices = @transform_3, window_bounds = array<i64: 2, 1>}, {pipeline_mode = #tpu.pipeline_mode<synchronous>, transform_indices = @transform_4, window_bounds = array<i64: 2, 4>}, {pipeline_mode = #tpu.pipeline_mode<synchronous>, transform_indices = @transform_5, window_bounds = array<i64: 2, 1>}, {pipeline_mode = #tpu.pipeline_mode<synchronous>, transform_indices = @transform_6, window_bounds = array<i64: 1, 64>}, {transform_indices = @transform_7, window_bounds = array<i64: 1, 4, 64>}]} {
    %c0 = arith.constant 0 : index
    %c0_0 = arith.constant 0 : index
    %c0_1 = arith.constant 0 : index
    %0 = vector.load %arg1[%c0, %c0_0, %c0_1] : memref<1x4x64xf32, #tpu.memory_space<vmem>>, vector<1x4x64xf32>
    %1 = vector.shape_cast %0 : vector<1x4x64xf32> to vector<4x64xf32>
    %c0_2 = arith.constant 0 : index
    %c0_3 = arith.constant 0 : index
    %c0_4 = arith.constant 0 : index
    %2 = vector.load %arg2[%c0_2, %c0_3, %c0_4] : memref<1x4x64xf32, #tpu.memory_space<vmem>>, vector<1x4x64xf32>
    %3 = vector.shape_cast %2 : vector<1x4x64xf32> to vector<4x64xf32>
    %c0_5 = arith.constant 0 : index
    %c0_6 = arith.constant 0 : index
    %4 = vector.load %arg3[%c0_5, %c0_6] : memref<2x4xf32, #tpu.memory_space<vmem>>, vector<2x4xf32>
    %c0_7 = arith.constant 0 : index
    %c0_8 = arith.constant 0 : index
    %5 = vector.load %arg5[%c0_7, %c0_8] : memref<2x4xf32, #tpu.memory_space<vmem>>, vector<2x4xf32>
    %c0_9 = arith.constant 0 : index
    %c0_10 = arith.constant 0 : index
    %6 = vector.load %arg4[%c0_9, %c0_10] : memref<2x1xf32, #tpu.memory_space<vmem>>, vector<2x1xf32>
    %c0_11 = arith.constant 0 : index
    %c0_12 = arith.constant 0 : index
    %7 = vector.load %arg6[%c0_11, %c0_12] : memref<2x1xf32, #tpu.memory_space<vmem>>, vector<2x1xf32>
    %c0_13 = arith.constant 0 : index
    %c0_14 = arith.constant 0 : index
    %8 = vector.load %arg7[%c0_13, %c0_14] : memref<1x64xf32, #tpu.memory_space<vmem>>, vector<1x64xf32>
    %cst = arith.constant dense<0.000000e+00> : vector<2x64xf32>
    %9 = tpu.matmul %4, %1, %cst {dimension_numbers = #tpu.dot_dimension_numbers<[1], [0], [0], [1], [0, 0, 1, 1], [], []>} : vector<2x4xf32>, vector<4x64xf32>, vector<2x64xf32> -> vector<2x64xf32>
    %10 = vector.broadcast %6 : vector<2x1xf32> to vector<2x64xf32>
    %11 = arith.addf %9, %10 : vector<2x64xf32>
    %12 = arith.negf %11 : vector<2x64xf32>
    %13 = math.exp %12 : vector<2x64xf32>
    %cst_15 = arith.constant 1.000000e+00 : f32
    %14 = vector.broadcast %cst_15 : f32 to vector<2x64xf32>
    %15 = arith.addf %14, %13 : vector<2x64xf32>
    %16 = arith.divf %14, %15 : vector<2x64xf32>
    %cst_16 = arith.constant dense<0.000000e+00> : vector<2x64xf32>
    %17 = tpu.matmul %5, %3, %cst_16 {dimension_numbers = #tpu.dot_dimension_numbers<[1], [0], [0], [1], [0, 0, 1, 1], [], []>} : vector<2x4xf32>, vector<4x64xf32>, vector<2x64xf32> -> vector<2x64xf32>
    %18 = vector.broadcast %7 : vector<2x1xf32> to vector<2x64xf32>
    %19 = arith.addf %17, %18 : vector<2x64xf32>
    %20 = arith.negf %19 : vector<2x64xf32>
    %21 = math.exp %20 : vector<2x64xf32>
    %cst_17 = arith.constant 1.000000e+00 : f32
    %22 = vector.broadcast %cst_17 : f32 to vector<2x64xf32>
    %23 = arith.addf %22, %21 : vector<2x64xf32>
    %24 = arith.divf %22, %23 : vector<2x64xf32>
    %25 = vector.broadcast %8 : vector<1x64xf32> to vector<2x64xf32>
    %26 = arith.mulf %24, %25 : vector<2x64xf32>
    %cst_18 = arith.constant dense<0.000000e+00> : vector<2xf32>
    %27 = vector.multi_reduction <add>, %26, %cst_18 [1] : vector<2x64xf32> to vector<2xf32>
    %28 = vector.shape_cast %27 : vector<2xf32> to vector<2x1xf32>
    %29 = vector.broadcast %28 : vector<2x1xf32> to vector<2x64xf32>
    %30 = arith.mulf %16, %29 : vector<2x64xf32>
    %cst_19 = arith.constant dense<0.000000e+00> : vector<64xf32>
    %31 = vector.multi_reduction <add>, %30, %cst_19 [0] : vector<2x64xf32> to vector<64xf32>
    %32 = vector.shape_cast %31 : vector<64xf32> to vector<1x64xf32>
    %33 = vector.broadcast %32 : vector<1x64xf32> to vector<4x64xf32>
    %34 = arith.mulf %1, %33 : vector<4x64xf32>
    %c0_20 = arith.constant 0 : index
    %c0_21 = arith.constant 0 : index
    %c0_22 = arith.constant 0 : index
    %35 = vector.load %arg8[%c0_20, %c0_21, %c0_22] : memref<1x4x64xf32, #tpu.memory_space<vmem>>, vector<1x4x64xf32>
    %36 = vector.shape_cast %35 : vector<1x4x64xf32> to vector<4x64xf32>
    %37 = vector.shape_cast %34 : vector<4x64xf32> to vector<1x4x64xf32>
    tpu.vector_store %arg8[%c0_20, %c0_21, %c0_22], %37 {strides = array<i32>} : memref<1x4x64xf32, #tpu.memory_space<vmem>>, vector<1x4x64xf32>,
    return
  }
  func.func @transform_0(%arg0: i32) -> (i32, i32, i32) {
    %c0_i32 = arith.constant 0 : i32
    %c0_i32_0 = arith.constant 0 : i32
    %c0_i32_1 = arith.constant 0 : i32
    return %arg0, %c0_i32, %c0_i32_0 : i32, i32, i32
  }
  func.func @transform_1(%arg0: i32) -> (i32, i32, i32) {
    %c0_i32 = arith.constant 0 : i32
    %c0_i32_0 = arith.constant 0 : i32
    %c0_i32_1 = arith.constant 0 : i32
    return %arg0, %c0_i32, %c0_i32_0 : i32, i32, i32
  }
  func.func @transform_2(%arg0: i32) -> (i32, i32) {
    %c0_i32 = arith.constant 0 : i32
    %c0_i32_0 = arith.constant 0 : i32
    %c0_i32_1 = arith.constant 0 : i32
    return %c0_i32, %c0_i32_0 : i32, i32
  }
  func.func @transform_3(%arg0: i32) -> (i32, i32) {
    %c0_i32 = arith.constant 0 : i32
    %c0_i32_0 = arith.constant 0 : i32
    %c0_i32_1 = arith.constant 0 : i32
    return %c0_i32, %c0_i32_0 : i32, i32
  }
  func.func @transform_4(%arg0: i32) -> (i32, i32) {
    %c0_i32 = arith.constant 0 : i32
    %c0_i32_0 = arith.constant 0 : i32
    %c0_i32_1 = arith.constant 0 : i32
    return %c0_i32, %c0_i32_0 : i32, i32
  }
  func.func @transform_5(%arg0: i32) -> (i32, i32) {
    %c0_i32 = arith.constant 0 : i32
    %c0_i32_0 = arith.constant 0 : i32
    %c0_i32_1 = arith.constant 0 : i32
    return %c0_i32, %c0_i32_0 : i32, i32
  }
  func.func @transform_6(%arg0: i32) -> (i32, i32) {
    %c0_i32 = arith.constant 0 : i32
    %c0_i32_0 = arith.constant 0 : i32
    %c0_i32_1 = arith.constant 0 : i32
    return %c0_i32, %c0_i32_0 : i32, i32
  }
  func.func @transform_7(%arg0: i32) -> (i32, i32, i32) {
    %c0_i32 = arith.constant 0 : i32
    %c0_i32_0 = arith.constant 0 : i32
    %c0_i32_1 = arith.constant 0 : i32
    return %arg0, %c0_i32, %c0_i32_0 : i32, i32, i32
  }
}

</mosaic_0001>

<llo_original>
// kernel: tpu_custom_call.1
$region0: #{tpu_custom_call.1}
  #allocation0 [shape = 'u32[]', space=smem, size = 0x4, offset = 0x4, fixed_abs, tag = 'smem constant byte address 0x4 - core index']
  #allocation1 [shape = 'u32[144,128]{1,0:T(1,128)}', space=vmem, size = 0x12000, scoped, tag = 'internal scratch']
  %s0 = inlined_call_operand.hbm [shape: f32[2,4,64], index: 0, kind: input, shape index: {}]
  %s1 = inlined_call_operand.vmem [shape: f32[2,4,64], index: 1, kind: input, shape index: {}]
  %s2 = inlined_call_operand.vmem [shape: f32[2,4], index: 2, kind: input, shape index: {}]
  %s3 = inlined_call_operand.vmem [shape: f32[2,1], index: 3, kind: input, shape index: {}]
  %s4 = inlined_call_operand.vmem [shape: f32[2,4], index: 4, kind: input, shape index: {}]
  %s5 = inlined_call_operand.vmem [shape: f32[2,1], index: 5, kind: input, shape index: {}]
  %s6 = inlined_call_operand.vmem [shape: f32[1,64], index: 6, kind: input, shape index: {}]
  %s7 = inlined_call_operand.hbm [shape: f32[2,4,64], index: 7, kind: output, shape index: {}]
  %s8 = sld [smem:[#allocation0]]
  $region65: #{tpu_custom_call.1} parent=0
    _
  %s10 = ssub.s32 1, %s8
  %s11 = scalar_select 0, %s10, %s8
  $region1: #{tpu_custom_call.1} parent=0
    #allocation2 [shape = 'u8[4096]{0}', space=vmem, size = 0x1000, scoped, tag = 'input window, operand 0']
    #allocation3 [shape = 's32[2]{0}', space=sflag, size = 0x8, scoped, tag = 'scoped memory for tpu_custom_call.1']
    #allocation4 [shape = 's32[2]{0}', space=sflag, size = 0x8, scoped, tag = 'scoped memory for tpu_custom_call.1']
    #allocation5 [shape = 'u8[4096]{0}', space=vmem, size = 0x1000, scoped, tag = 'output window, operand 0']
    %12 = vsyncpa [#allocation3], 0
    %s13 = scalar_lea.sflag [#allocation3], 1
    %14 = vsyncpa %s13, 0
    %15 = vsyncpa [#allocation4], 0
    %s16 = scalar_lea.sflag [#allocation4], 1
    %17 = vsyncpa %s16, 0
    loop: start=0, step=1, limit=4
    $region2: #{tpu_custom_call.1} parent=1 // loop_pre_header
      _
    $region3: #{tpu_custom_call.1} parent=1 // loop_header
      %s19 = sphi 0, %s23
      %p20 = scmp.ge.s32.totalorder %s19, 4
      %s29 = sphi 0, %s31
      %s32 = sphi 0, %s29
      %s33 = sphi 0, %s32
      %s49 = sphi 0, %s33
      %s55 = sphi 0, %s57
      %s58 = sphi 0, %s55
      %s59 = sphi 0, %s58
      %s75 = sphi 0, %s59
      %s79 = sphi 0, %s79
      %s81 = sphi 0, %s79
      %s82 = sphi 0, %s81
      %s96 = sphi 0, %s82
      %s100 = sphi 0, %s100
      %s102 = sphi 0, %s100
      %s103 = sphi 0, %s102
      %s117 = sphi 0, %s103
      %s121 = sphi 0, %s121
      %s123 = sphi 0, %s121
      %s124 = sphi 0, %s123
      %s138 = sphi 0, %s124
      %s142 = sphi 0, %s142
      %s144 = sphi 0, %s142
      %s145 = sphi 0, %s144
      %s159 = sphi 0, %s145
      %s163 = sphi 0, %s163
      %s165 = sphi 0, %s163
      %s166 = sphi 0, %s165
      %s180 = sphi 0, %s166
      %s186 = sphi 0, %s188
      %s189 = sphi 0, %s186
      %s190 = sphi 0, %s189
      %s206 = sphi 0, %s190
    $region4: #{tpu_custom_call.1} parent=1 // loop_header_branch
      %22 = sbr.rel (%p20) target = $region8
    $region5: #{tpu_custom_call.1} parent=1 // loop_body
      %s24 = ssub.s32 %s19, 1
      %s25 = ssub.s32 %s19, 2
      %s26 = sadd.s32 %s19, 1
      %s27 = ssub.s32 %s19, %s26
      %p28 = scmp.eq.s32.totalorder %s27, 0
      %s30 = sadd.s32 %s29, 1
      %s31 = scalar_select %p28, %s29, %s30
      %p34 = pneg %p28
      %p35 = scmp.eq.s32.totalorder %s19, 1
      %p36 = por %p34, %p35
      %p37 = scmp.ne.s32.totalorder %s29, %s32
      %p38 = scmp.eq.s32.totalorder %s19, 0
      %p39 = por %p37, %p38
      %p40 = scmp.ne.s32.totalorder %s29, %s32
      %p41 = scmp.eq.s32.totalorder %s24, 1
      %p42 = por %p40, %p41
      %p43 = scmp.ne.s32.totalorder %s32, %s33
      %p44 = scmp.eq.s32.totalorder %s24, 0
      %p45 = por %p43, %p44
      %p46 = scmp.ne.s32.totalorder %s32, %s33
      %p47 = scmp.eq.s32.totalorder %s25, 1
      %p48 = por %p46, %p47
      %p50 = scmp.ne.s32.totalorder %s33, %s49
      %p51 = scmp.eq.s32.totalorder %s25, 0
      %p52 = por %p50, %p51
      %s53 = ssub.s32 %s19, %s26
      %p54 = scmp.eq.s32.totalorder %s53, 0
      %s56 = sadd.s32 %s55, 1
      %s57 = scalar_select %p54, %s55, %s56
      %p60 = pneg %p54
      %p61 = scmp.eq.s32.totalorder %s19, 1
      %p62 = por %p60, %p61
      %p63 = scmp.ne.s32.totalorder %s55, %s58
      %p64 = scmp.eq.s32.totalorder %s19, 0
      %p65 = por %p63, %p64
      %p66 = scmp.ne.s32.totalorder %s55, %s58
      %p67 = scmp.eq.s32.totalorder %s24, 1
      %p68 = por %p66, %p67
      %p69 = scmp.ne.s32.totalorder %s58, %s59
      %p70 = scmp.eq.s32.totalorder %s24, 0
      %p71 = por %p69, %p70
      %p72 = scmp.ne.s32.totalorder %s58, %s59
      %p73 = scmp.eq.s32.totalorder %s25, 1
      %p74 = por %p72, %p73
      %p76 = scmp.ne.s32.totalorder %s59, %s75
      %p77 = scmp.eq.s32.totalorder %s25, 0
      %p78 = por %p76, %p77
      %s80 = sadd.s32 %s79, 1
      %p83 = scmp.eq.s32.totalorder %s19, 1
      %p84 = scmp.ne.s32.totalorder %s79, %s81
      %p85 = scmp.eq.s32.totalorder %s19, 0
      %p86 = por %p84, %p85
      %p87 = scmp.ne.s32.totalorder %s79, %s81
      %p88 = scmp.eq.s32.totalorder %s24, 1
      %p89 = por %p87, %p88
      %p90 = scmp.ne.s32.totalorder %s81, %s82
      %p91 = scmp.eq.s32.totalorder %s24, 0
      %p92 = por %p90, %p91
      %p93 = scmp.ne.s32.totalorder %s81, %s82
      %p94 = scmp.eq.s32.totalorder %s25, 1
      %p95 = por %p93, %p94
      %p97 = scmp.ne.s32.totalorder %s82, %s96
      %p98 = scmp.eq.s32.totalorder %s25, 0
      %p99 = por %p97, %p98
      %s101 = sadd.s32 %s100, 1
      %p104 = scmp.eq.s32.totalorder %s19, 1
      %p105 = scmp.ne.s32.totalorder %s100, %s102
      %p106 = scmp.eq.s32.totalorder %s19, 0
      %p107 = por %p105, %p106
      %p108 = scmp.ne.s32.totalorder %s100, %s102
      %p109 = scmp.eq.s32.totalorder %s24, 1
      %p110 = por %p108, %p109
      %p111 = scmp.ne.s32.totalorder %s102, %s103
      %p112 = scmp.eq.s32.totalorder %s24, 0
      %p113 = por %p111, %p112
      %p114 = scmp.ne.s32.totalorder %s102, %s103
      %p115 = scmp.eq.s32.totalorder %s25, 1
      %p116 = por %p114, %p115
      %p118 = scmp.ne.s32.totalorder %s103, %s117
      %p119 = scmp.eq.s32.totalorder %s25, 0
      %p120 = por %p118, %p119
      %s122 = sadd.s32 %s121, 1
      %p125 = scmp.eq.s32.totalorder %s19, 1
      %p126 = scmp.ne.s32.totalorder %s121, %s123
      %p127 = scmp.eq.s32.totalorder %s19, 0
      %p128 = por %p126, %p127
      %p129 = scmp.ne.s32.totalorder %s121, %s123
      %p130 = scmp.eq.s32.totalorder %s24, 1
      %p131 = por %p129, %p130
      %p132 = scmp.ne.s32.totalorder %s123, %s124
      %p133 = scmp.eq.s32.totalorder %s24, 0
      %p134 = por %p132, %p133
      %p135 = scmp.ne.s32.totalorder %s123, %s124
      %p136 = scmp.eq.s32.totalorder %s25, 1
      %p137 = por %p135, %p136
      %p139 = scmp.ne.s32.totalorder %s124, %s138
      %p140 = scmp.eq.s32.totalorder %s25, 0
      %p141 = por %p139, %p140
      %s143 = sadd.s32 %s142, 1
      %p146 = scmp.eq.s32.totalorder %s19, 1
      %p147 = scmp.ne.s32.totalorder %s142, %s144
      %p148 = scmp.eq.s32.totalorder %s19, 0
      %p149 = por %p147, %p148
      %p150 = scmp.ne.s32.totalorder %s142, %s144
      %p151 = scmp.eq.s32.totalorder %s24, 1
      %p152 = por %p150, %p151
      %p153 = scmp.ne.s32.totalorder %s144, %s145
      %p154 = scmp.eq.s32.totalorder %s24, 0
      %p155 = por %p153, %p154
      %p156 = scmp.ne.s32.totalorder %s144, %s145
      %p157 = scmp.eq.s32.totalorder %s25, 1
      %p158 = por %p156, %p157
      %p160 = scmp.ne.s32.totalorder %s145, %s159
      %p161 = scmp.eq.s32.totalorder %s25, 0
      %p162 = por %p160, %p161
      %s164 = sadd.s32 %s163, 1
      %p167 = scmp.eq.s32.totalorder %s19, 1
      %p168 = scmp.ne.s32.totalorder %s163, %s165
      %p169 = scmp.eq.s32.totalorder %s19, 0
      %p170 = por %p168, %p169
      %p171 = scmp.ne.s32.totalorder %s163, %s165
      %p172 = scmp.eq.s32.totalorder %s24, 1
      %p173 = por %p171, %p172
      %p174 = scmp.ne.s32.totalorder %s165, %s166
      %p175 = scmp.eq.s32.totalorder %s24, 0
      %p176 = por %p174, %p175
      %p177 = scmp.ne.s32.totalorder %s165, %s166
      %p178 = scmp.eq.s32.totalorder %s25, 1
      %p179 = por %p177, %p178
      %p181 = scmp.ne.s32.totalorder %s166, %s180
      %p182 = scmp.eq.s32.totalorder %s25, 0
      %p183 = por %p181, %p182
      %s184 = ssub.s32 %s19, %s26
      %p185 = scmp.eq.s32.totalorder %s184, 0
      %s187 = sadd.s32 %s186, 1
      %s188 = scalar_select %p185, %s186, %s187
      %p191 = pneg %p185
      %p192 = scmp.eq.s32.totalorder %s19, 1
      %p193 = por %p191, %p192
      %p194 = scmp.ne.s32.totalorder %s186, %s189
      %p195 = scmp.eq.s32.totalorder %s19, 0
      %p196 = por %p194, %p195
      %p197 = scmp.ne.s32.totalorder %s186, %s189
      %p198 = scmp.eq.s32.totalorder %s24, 1
      %p199 = por %p197, %p198
      %p200 = scmp.ne.s32.totalorder %s189, %s190
      %p201 = scmp.eq.s32.totalorder %s24, 0
      %p202 = por %p200, %p201
      %p203 = scmp.ne.s32.totalorder %s189, %s190
      %p204 = scmp.eq.s32.totalorder %s25, 1
      %p205 = por %p203, %p204
      %p207 = scmp.ne.s32.totalorder %s190, %s206
      %p208 = scmp.eq.s32.totalorder %s25, 0
      %p209 = por %p207, %p208
      %p210 = scmp.le.s32.totalorder 1, %s19
      %p211 = scmp.lt.s32.totalorder %s19, 3
      %p212 = pnand %p210, %p211
      %p213 = pneg %p212
      // Predicated region
      $region9: #{tpu_custom_call.1} parent=5 // pred_check
        _
      $region10: #{tpu_custom_call.1} parent=5 // pred_check_branch
        %215 = sbr.rel (%p212) target = $region12
      $region11: #{tpu_custom_call.1} parent=5 // pred_region
        %s216 = ssub.s32 %s19, 1
        // Predicated region
        $region13: #{tpu_custom_call.1} parent=11 // pred_check
          %p217 = pneg %p92
        $region14: #{tpu_custom_call.1} parent=11 // pred_check_branch
          %219 = sbr.rel (%p217) target = $region16
        $region15: #{tpu_custom_call.1} parent=11 // pred_region
          _
        $region16: #{tpu_custom_call.1} parent=11 // pred_fallthru
          _
        // Predicated region
        $region17: #{tpu_custom_call.1} parent=11 // pred_check
          %p220 = pneg %p113
        $region18: #{tpu_custom_call.1} parent=11 // pred_check_branch
          %222 = sbr.rel (%p220) target = $region20
        $region19: #{tpu_custom_call.1} parent=11 // pred_region
          _
        $region20: #{tpu_custom_call.1} parent=11 // pred_fallthru
          _
        // Predicated region
        $region21: #{tpu_custom_call.1} parent=11 // pred_check
          %p223 = pneg %p134
        $region22: #{tpu_custom_call.1} parent=11 // pred_check_branch
          %225 = sbr.rel (%p223) target = $region24
        $region23: #{tpu_custom_call.1} parent=11 // pred_region
          _
        $region24: #{tpu_custom_call.1} parent=11 // pred_fallthru
          _
        // Predicated region
        $region25: #{tpu_custom_call.1} parent=11 // pred_check
          %p226 = pneg %p155
        $region26: #{tpu_custom_call.1} parent=11 // pred_check_branch
          %228 = sbr.rel (%p226) target = $region28
        $region27: #{tpu_custom_call.1} parent=11 // pred_region
          _
        $region28: #{tpu_custom_call.1} parent=11 // pred_fallthru
          _
        // Predicated region
        $region29: #{tpu_custom_call.1} parent=11 // pred_check
          %p229 = pneg %p176
        $region30: #{tpu_custom_call.1} parent=11 // pred_check_branch
          %231 = sbr.rel (%p229) target = $region32
        $region31: #{tpu_custom_call.1} parent=11 // pred_region
          _
        $region32: #{tpu_custom_call.1} parent=11 // pred_fallthru
          _
      $region12: #{tpu_custom_call.1} parent=5 // pred_fallthru
        _
      %p232 = scmp.lt.s32.totalorder %s19, 2
      // Predicated region
      $region33: #{tpu_custom_call.1} parent=5 // pred_check
        %p233 = pneg %p232
      $region34: #{tpu_custom_call.1} parent=5 // pred_check_branch
        %235 = sbr.rel (%p233) target = $region36
      $region35: #{tpu_custom_call.1} parent=5 // pred_region
        // Predicated region
        $region37: #{tpu_custom_call.1} parent=35 // pred_check
          %p236 = pneg %p39
        $region38: #{tpu_custom_call.1} parent=35 // pred_check_branch
          %238 = sbr.rel (%p236) target = $region40
        $region39: #{tpu_custom_call.1} parent=35 // pred_region
          %s239 = sand.u32 %s29, 1
          %s240 = scalar_lea.sflag [#allocation3], %s239
          %s241 = sand.u32 %s29, 1
          %s242 = smul.addr %s241, 4
          %s243 = scalar_lea.vmem [#allocation2], %s242
          %s245 = ssub.s32 64, 64
          %246 = vsyncadd %s240, %s245
          %s247 = smul.addr %s19, 64
          %s248 = scalar_lea.hbm %s0, %s247
          %s250 = sshll.u32 %s243, 4
          %s251 = int_to_ptr.vmem [resolvable:$true] %s250
          %253 = dma.hbm_to_vmem [thread:$0]  %s248, 64, %s251, %s240
        $region40: #{tpu_custom_call.1} parent=35 // pred_fallthru
          _
        // Predicated region
        $region41: #{tpu_custom_call.1} parent=35 // pred_check
          %p254 = pneg %p65
        $region42: #{tpu_custom_call.1} parent=35 // pred_check_branch
          %256 = sbr.rel (%p254) target = $region44
        $region43: #{tpu_custom_call.1} parent=35 // pred_region
          %p257 = scmp.lt.s32.totalorder %s19, 1
          %s258 = scalar_select %p257, %s19, 1
          %s259 = smul.addr %s258, 4
          %s260 = scalar_lea.vmem %s1, %s259
        $region44: #{tpu_custom_call.1} parent=35 // pred_fallthru
          _
      $region36: #{tpu_custom_call.1} parent=5 // pred_fallthru
        _
      %p261 = scmp.le.s32.totalorder 1, %s19
      %p262 = scmp.lt.s32.totalorder %s19, 3
      %p263 = pnand %p261, %p262
      %p264 = pneg %p263
      // Predicated region
      $region45: #{tpu_custom_call.1} parent=5 // pred_check
        _
      $region46: #{tpu_custom_call.1} parent=5 // pred_check_branch
        %266 = sbr.rel (%p263) target = $region48
      $region47: #{tpu_custom_call.1} parent=5 // pred_region
        %s267 = ssub.s32 %s19, 1
        %s268 = sand.u32 %s32, 1
        %s269 = scalar_lea.sflag [#allocation3], %s268
        %s270 = sand.u32 %s32, 1
        %s271 = smul.addr %s270, 4
        %s272 = scalar_lea.vmem [#allocation2], %s271
        // Predicated region
        $region49: #{tpu_custom_call.1} parent=47 // pred_check
          %p273 = pneg %p45
        $region50: #{tpu_custom_call.1} parent=47 // pred_check_branch
          %275 = sbr.rel (%p273) target = $region52
        $region51: #{tpu_custom_call.1} parent=47 // pred_region
          %276 = dma.done %s269, 64
        $region52: #{tpu_custom_call.1} parent=47 // pred_fallthru
          _
        %s277 = sand.u32 %s32, 1
        %s278 = scalar_lea.sflag [#allocation3], %s277
        %s279 = sand.u32 %s32, 1
        %s280 = smul.addr %s279, 4
        %s281 = scalar_lea.vmem [#allocation2], %s280
        %p282 = pneg %p45
        %p283 = pneg %p42
        %p284 = scmp.lt.s32.totalorder %s24, 1
        %s285 = scalar_select %p284, %s24, 1
        %s286 = smul.addr %s285, 4
        %s287 = scalar_lea.vmem %s1, %s286
        %p288 = pneg %p71
        %p289 = pneg %p68
        %p290 = pneg %p92
        %p291 = pneg %p89
        %p292 = pneg %p113
        %p293 = pneg %p110
        %p294 = pneg %p134
        %p295 = pneg %p131
        %p296 = pneg %p155
        %p297 = pneg %p152
        %p298 = pneg %p176
        %p299 = pneg %p173
        %p300 = pneg %p202
        %p301 = pneg %p199
        %s302 = sand.u32 %s189, 1
        %s303 = scalar_lea.sflag [#allocation4], %s302
        %s304 = sand.u32 %s189, 1
        %s305 = smul.addr %s304, 4
        %s306 = scalar_lea.vmem [#allocation5], %s305
        %p307 = scmp.lt.s32.totalorder %s24, 1
        %s308 = scalar_select %p307, %s24, 1
        %s309 = smul.addr %s308, 4
        %s310 = scalar_lea.vmem %s1, %s309
        %v311 = vld [vmem:[%s272] sm:$0xf]
        %v312 = vld [vmem:[%s310] sm:$0xf]
        %v313 = vld [vmem:[%s2] sm:$0x3]
        %v314 = vld [vmem:[%s4] sm:$0x3]
        %v315 = vld [vmem:[%s3] sm:$0x3]
        %v316 = vld [vmem:[%s5] sm:$0x3]
        %v317 = vld [vmem:[%s6] sm:$0x1]
        %319 = vset.pattern.permute.xlu0 0
        %320 = vperm.xlu0 %319, %v315
        %v321 = vpop.permute.xlu0 %320
        %vm323 = vcmask 31744
        %v325 = vsel %vm323, %v313, 0
        %vm327 = vcmask 1043456
        %v329 = vsel %vm327, %v311, 0
        %331 = vmatprep.subr.mxu0 0.0
        %332 = vmatpush1.msra.mxu0 %v329
        %333 = vmatprep.subr.mxu0 0.0
        %334 = vmatpush1.msra.mxu0 0.0
        %335 = vmatprep.subr.mxu0 0.0
        %336 = vmatpush1.msra.mxu0 0.0
        %337 = vmatprep.subr.mxu0 0.0
        %338 = vmatpush1.msra.mxu0 0.0
        %339 = vmatprep.subr.mxu0 0.0
        %340 = vmatpush1.msra.mxu0 0.0
        %341 = vmatprep.subr.mxu0 0.0
        %342 = vmatpush1.msra.mxu0 0.0
        %343 = vmatprep.subr.mxu0 0.0
        %344 = vmatpush1.msra.mxu0 0.0
        %345 = vmatprep.subr.mxu0 0.0
        %346 = vmatpush1.msra.mxu0 0.0
        %347 = vmatprep.subr.mxu0 0.0
        %348 = vmatpush1.msra.mxu0 0.0
        %349 = vmatprep.subr.mxu0 0.0
        %350 = vmatpush1.msra.mxu0 0.0
        %351 = vmatprep.subr.mxu0 0.0
        %352 = vmatpush1.msra.mxu0 0.0
        %353 = vmatprep.subr.mxu0 0.0
        %354 = vmatpush1.msra.mxu0 0.0
        %355 = vmatprep.subr.mxu0 0.0
        %356 = vmatpush1.msra.mxu0 0.0
        %357 = vmatprep.subr.mxu0 0.0
        %358 = vmatpush1.msra.mxu0 0.0
        %359 = vmatprep.subr.mxu0 0.0
        %360 = vmatpush1.msra.mxu0 0.0
        %361 = vmatprep.subr.mxu0 0.0
        %362 = vmatpush1.msra.mxu0 0.0
        %363 = vmatprep.subr.mxu0 0.0
        %364 = vmatpush1.msra.mxu0 0.0
        %365 = vmatprep.subr.mxu0 0.0
        %366 = vmatpush1.msra.mxu0 0.0
        %367 = vmatprep.subr.mxu0 0.0
        %368 = vmatpush1.msra.mxu0 0.0
        %369 = vmatprep.subr.mxu0 0.0
        %370 = vmatpush1.msra.mxu0 0.0
        %371 = vmatprep.subr.mxu0 0.0
        %372 = vmatpush1.msra.mxu0 0.0
        %373 = vmatprep.subr.mxu0 0.0
        %374 = vmatpush1.msra.mxu0 0.0
        %375 = vmatprep.subr.mxu0 0.0
        %376 = vmatpush1.msra.mxu0 0.0
        %377 = vmatprep.subr.mxu0 0.0
        %378 = vmatpush1.msra.mxu0 0.0
        %379 = vmatprep.subr.mxu0 0.0
        %380 = vmatpush1.msra.mxu0 0.0
        %381 = vmatprep.subr.mxu0 0.0
        %382 = vmatpush1.msra.mxu0 0.0
        %383 = vmatprep.subr.mxu0 0.0
        %384 = vmatpush1.msra.mxu0 0.0
        %385 = vmatprep.subr.mxu0 0.0
        %386 = vmatpush1.msra.mxu0 0.0
        %387 = vmatprep.subr.mxu0 0.0
        %388 = vmatpush1.msra.mxu0 0.0
        %389 = vmatprep.subr.mxu0 0.0
        %390 = vmatpush1.msra.mxu0 0.0
        %391 = vmatprep.subr.mxu0 0.0
        %392 = vmatpush1.msra.mxu0 0.0
        %393 = vmatprep.subr.mxu0 0.0
        %394 = vmatpush1.msra.mxu0 0.0
        %395 = vmatprep.mubr.f32.mxu0 0.0
        %396 = vmatmul.mubr.f32.gmra.mrb[0].mxu0 %v325
        %v397 = vpop.f32.mrb[0].mxu0
        %v398 = vadd.f32 %v321, %v397
        %v399 = vpop.f32.mrb[0].mxu0
        %400 = vdwg.mxu0
        %v401 = vxor.u32 %v398, 2147483648
        %v402 = vmul.f32 %v401, 1.442695
        %v403 = vpow.pop %v402
        %v404 = vadd.f32 %v403, 1.0
        %v405 = vrcp.pop %v404
        %v406 = vmul.f32 1.0, %v405
        %408 = vset.pattern.permute.xlu0 0
        %409 = vperm.xlu0 %408, %v316
        %v410 = vpop.permute.xlu0 %409
        %v413 = vsel %vm323, %v314, 0
        %v416 = vsel %vm327, %v312, 0
        %418 = vmatprep.subr.mxu0 0.0
        %419 = vmatpush1.msra.mxu0 %v416
        %420 = vmatprep.subr.mxu0 0.0
        %421 = vmatpush1.msra.mxu0 0.0
        %422 = vmatprep.subr.mxu0 0.0
        %423 = vmatpush1.msra.mxu0 0.0
        %424 = vmatprep.subr.mxu0 0.0
        %425 = vmatpush1.msra.mxu0 0.0
        %426 = vmatprep.subr.mxu0 0.0
        %427 = vmatpush1.msra.mxu0 0.0
        %428 = vmatprep.subr.mxu0 0.0
        %429 = vmatpush1.msra.mxu0 0.0
        %430 = vmatprep.subr.mxu0 0.0
        %431 = vmatpush1.msra.mxu0 0.0
        %432 = vmatprep.subr.mxu0 0.0
        %433 = vmatpush1.msra.mxu0 0.0
        %434 = vmatprep.subr.mxu0 0.0
        %435 = vmatpush1.msra.mxu0 0.0
        %436 = vmatprep.subr.mxu0 0.0
        %437 = vmatpush1.msra.mxu0 0.0
        %438 = vmatprep.subr.mxu0 0.0
        %439 = vmatpush1.msra.mxu0 0.0
        %440 = vmatprep.subr.mxu0 0.0
        %441 = vmatpush1.msra.mxu0 0.0
        %442 = vmatprep.subr.mxu0 0.0
        %443 = vmatpush1.msra.mxu0 0.0
        %444 = vmatprep.subr.mxu0 0.0
        %445 = vmatpush1.msra.mxu0 0.0
        %446 = vmatprep.subr.mxu0 0.0
        %447 = vmatpush1.msra.mxu0 0.0
        %448 = vmatprep.subr.mxu0 0.0
        %449 = vmatpush1.msra.mxu0 0.0
        %450 = vmatprep.subr.mxu0 0.0
        %451 = vmatpush1.msra.mxu0 0.0
        %452 = vmatprep.subr.mxu0 0.0
        %453 = vmatpush1.msra.mxu0 0.0
        %454 = vmatprep.subr.mxu0 0.0
        %455 = vmatpush1.msra.mxu0 0.0
        %456 = vmatprep.subr.mxu0 0.0
        %457 = vmatpush1.msra.mxu0 0.0
        %458 = vmatprep.subr.mxu0 0.0
        %459 = vmatpush1.msra.mxu0 0.0
        %460 = vmatprep.subr.mxu0 0.0
        %461 = vmatpush1.msra.mxu0 0.0
        %462 = vmatprep.subr.mxu0 0.0
        %463 = vmatpush1.msra.mxu0 0.0
        %464 = vmatprep.subr.mxu0 0.0
        %465 = vmatpush1.msra.mxu0 0.0
        %466 = vmatprep.subr.mxu0 0.0
        %467 = vmatpush1.msra.mxu0 0.0
        %468 = vmatprep.subr.mxu0 0.0
        %469 = vmatpush1.msra.mxu0 0.0
        %470 = vmatprep.subr.mxu0 0.0
        %471 = vmatpush1.msra.mxu0 0.0
        %472 = vmatprep.subr.mxu0 0.0
        %473 = vmatpush1.msra.mxu0 0.0
        %474 = vmatprep.subr.mxu0 0.0
        %475 = vmatpush1.msra.mxu0 0.0
        %476 = vmatprep.subr.mxu0 0.0
        %477 = vmatpush1.msra.mxu0 0.0
        %478 = vmatprep.subr.mxu0 0.0
        %479 = vmatpush1.msra.mxu0 0.0
        %480 = vmatprep.subr.mxu0 0.0
        %481 = vmatpush1.msra.mxu0 0.0
        %482 = vmatprep.mubr.f32.mxu0 0.0
        %483 = vmatmul.mubr.f32.gmra.mrb[0].mxu0 %v413
        %v484 = vpop.f32.mrb[0].mxu0
        %v485 = vadd.f32 %v410, %v484
        %v486 = vpop.f32.mrb[0].mxu0
        %487 = vdwg.mxu0
        %v488 = vxor.u32 %v485, 2147483648
        %v489 = vmul.f32 %v488, 1.442695
        %v490 = vpow.pop %v489
        %v491 = vadd.f32 %v490, 1.0
        %v492 = vrcp.pop %v491
        %v493 = vmul.f32 1.0, %v492
        %v495 = vlaneseq
        %v496 = vshrl.u32 %v495, 7
        %v497 = vsub.s32 0, %v496
        %v498 = vrot.slane %v317, %v497
        %v500 = vmul.f32 %v493, %v498
        %vm501 = vcmask 517120
        %v502 = vsel %vm501, %v500, 0.0
        %503 = vadd.xlane.f32.xlu0 %v502
        %v504 = vpop.xlane.xlu0 %503
        %v505 = vmul.f32 %v406, %v504
        %v506 = vsel %vm501, %v505, 0.0
        %v507 = vrot.slane %v506, 4
        %v508 = vadd.f32 %v506, %v507
        %v509 = vrot.slane %v508, 2
        %v510 = vadd.f32 %v508, %v509
        %v511 = vrot.slane %v510, 1
        %v512 = vadd.f32 %v510, %v511
        %v513 = vmul.f32 %v311, %v512
        %vm514 = vcmask 519168
        %515 = vst.msk [vmem:[%s306] sm:$0xf] %vm514, %v513
        %s516 = sand.u32 %s189, 1
        %s517 = scalar_lea.sflag [#allocation4], %s516
        %s518 = sand.u32 %s189, 1
        %s519 = smul.addr %s518, 4
        %s520 = scalar_lea.vmem [#allocation5], %s519
        // Predicated region
        $region53: #{tpu_custom_call.1} parent=47 // pred_check
          %p521 = pneg %p199
        $region54: #{tpu_custom_call.1} parent=47 // pred_check_branch
          %523 = sbr.rel (%p521) target = $region56
        $region55: #{tpu_custom_call.1} parent=47 // pred_region
          %s525 = ssub.s32 64, 64
          %526 = vsyncadd %s517, %s525
          %s527 = smul.addr %s24, 64
          %s528 = scalar_lea.hbm %s7, %s527
          %s530 = sshll.u32 %s520, 4
          %s531 = int_to_ptr.vmem [resolvable:$true] %s530
          %533 = dma.vmem_to_hbm [thread:$0]  %s531, 64, %s528, %s517
        $region56: #{tpu_custom_call.1} parent=47 // pred_fallthru
          _
      $region48: #{tpu_custom_call.1} parent=5 // pred_fallthru
        _
      %p534 = scmp.le.s32.totalorder 2, %s19
      // Predicated region
      $region57: #{tpu_custom_call.1} parent=5 // pred_check
        %p535 = pneg %p534
      $region58: #{tpu_custom_call.1} parent=5 // pred_check_branch
        %537 = sbr.rel (%p535) target = $region60
      $region59: #{tpu_custom_call.1} parent=5 // pred_region
        %s538 = ssub.s32 %s19, 2
        // Predicated region
        $region61: #{tpu_custom_call.1} parent=59 // pred_check
          %p539 = pneg %p205
        $region62: #{tpu_custom_call.1} parent=59 // pred_check_branch
          %541 = sbr.rel (%p539) target = $region64
        $region63: #{tpu_custom_call.1} parent=59 // pred_region
          %s542 = sand.u32 %s190, 1
          %s543 = scalar_lea.sflag [#allocation4], %s542
          %s544 = sand.u32 %s190, 1
          %s545 = smul.addr %s544, 4
          %s546 = scalar_lea.vmem [#allocation5], %s545
          %547 = dma.done %s543, 64
        $region64: #{tpu_custom_call.1} parent=59 // pred_fallthru
          _
      $region60: #{tpu_custom_call.1} parent=5 // pred_fallthru
        _
    $region6: #{tpu_custom_call.1} parent=1 // loop_footer
      %s23 = sadd.s32 1, %s19
    $region7: #{tpu_custom_call.1} parent=1 // loop_footer_branch
      %18 = sbr.rel target = $region3
    $region8: #{tpu_custom_call.1} parent=1 // loop_exit
      _
    %548 = vsyncpa [#allocation3], 1
    %s549 = scalar_lea.sflag [#allocation3], 1
    %550 = vsyncpa %s549, 1
    %551 = vsyncpa [#allocation4], 1
    %s552 = scalar_lea.sflag [#allocation4], 1
    %553 = vsyncpa %s552, 1

</llo_original>
